<compile_context>
chip_gen: v5e
topology: v5e:2x2
jax: 0.10.0
libtpu: 0.0.40
codegen_flags: <defaults>
</compile_context>

<pallas_src>
import numpy as np
import jax
import jax.numpy as jnp
from jax.experimental import pallas as pl
from jax.experimental.pallas import tpu as pltpu


def _sinusoid_table(cav_num: int, d_hid: int) -> np.ndarray:
    """Deterministic sinusoid position-encoding table, same math as PyTorch."""
    pos = np.arange(cav_num)[:, None].astype(np.float64)            # (L, 1)
    hid = np.arange(d_hid)[None, :]                                  # (1, D)
    angle = pos / np.power(10000.0, 2.0 * (hid // 2) / d_hid)        # (L, D)
    table = np.array(angle)
    table[:, 0::2] = np.sin(table[:, 0::2])
    table[:, 1::2] = np.cos(table[:, 1::2])
    return table.astype(np.float32)


def _cav_pe_kernel(x_ref, pos_ref, o_ref):
    # x_ref:   (1, L, H, W*D) block for grid point b
    # pos_ref: (L, 1, W*D)    full pre-tiled positional table (resident in VMEM)
    # o_ref:   (1, L, H, W*D)
    # Implicit broadcast of pos over the leading 1 and over H (sublane axis).
    o_ref[...] = x_ref[...] + pos_ref[...]


def cav_positional_encoding(x: jax.Array, pos_table: jax.Array) -> jax.Array:
    """x: (B, L, H, W, D); pos_table: (L, D). Returns x + pos (broadcast over B, H, W)."""
    B, L, H, W, D = x.shape
    assert pos_table.shape == (L, D)
    WD = W * D

    # Free reshape (contiguous trailing dims) -> lane-dense last dim of W*D.
    x_flat = x.reshape(B, L, H, WD)
    # Pre-tile the table along W so pos_wd[l, 0, w*D + d] == pos_table[l, d].
    pos_wd = jnp.tile(pos_table, (1, W)).reshape(L, 1, WD).astype(x.dtype)

    out_flat = pl.pallas_call(
        _cav_pe_kernel,
        out_shape=jax.ShapeDtypeStruct((B, L, H, WD), x.dtype),
        grid_spec=pltpu.PrefetchScalarGridSpec(
            num_scalar_prefetch=0,
            grid=(B,),
            in_specs=[
                pl.BlockSpec((1, L, H, WD), lambda b: (b, 0, 0, 0)),
                pl.BlockSpec((L, 1, WD), lambda b: (0, 0, 0)),
            ],
            out_specs=pl.BlockSpec((1, L, H, WD), lambda b: (b, 0, 0, 0)),
        ),
        compiler_params=pltpu.CompilerParams(
            dimension_semantics=("parallel",),
        ),
    )(x_flat, pos_wd)

    return out_flat.reshape(B, L, H, W, D)


if __name__ == "__main__":
    # Small shapes consistent with the module: B=2, cav_num=5, H=W=16, d_hid=32.
    B, L, H, W, D = 2, 5, 16, 16, 32

    key = jax.random.PRNGKey(0)
    x = jax.random.normal(key, (B, L, H, W, D), dtype=jnp.float32)

    pos_table = jnp.asarray(_sinusoid_table(L, D))  # (L, D), deterministic

    # Reference (plain JAX broadcasting, mirrors the PyTorch forward).
    ref = x + pos_table[None, :, None, None, :]

    out = cav_positional_encoding(x, pos_table)
    out = jax.block_until_ready(out)

    np.testing.assert_allclose(np.asarray(out), np.asarray(ref), rtol=1e-6, atol=1e-6)

    print("KERNEL_OK")
</pallas_src>

<mosaic_0001>
module attributes {stable_mosaic.version = 11 : i64} {
  func.func @_cav_pe_kernel(%arg0: i32, %arg1: memref<1x5x16x512xf32, #tpu.memory_space<vmem>>, %arg2: memref<5x1x512xf32, #tpu.memory_space<vmem>>, %arg3: memref<1x5x16x512xf32, #tpu.memory_space<vmem>>) attributes {dimension_semantics = [#tpu.dimension_semantics<parallel>], iteration_bounds = array<i64: 2>, scalar_prefetch = 0 : i64, scratch_operands = 0 : i64, tpu.core_type = #tpu.core_type<tc>, window_params = [{transform_indices = @transform_0, window_bounds = array<i64: 1, 5, 16, 512>}, {pipeline_mode = #tpu.pipeline_mode<synchronous>, transform_indices = @transform_1, window_bounds = array<i64: 5, 1, 512>}, {transform_indices = @transform_2, window_bounds = array<i64: 1, 5, 16, 512>}]} {
    %c0 = arith.constant 0 : index
    %c0_0 = arith.constant 0 : index
    %c0_1 = arith.constant 0 : index
    %c0_2 = arith.constant 0 : index
    %0 = vector.load %arg1[%c0, %c0_0, %c0_1, %c0_2] : memref<1x5x16x512xf32, #tpu.memory_space<vmem>>, vector<1x5x16x512xf32>
    %c0_3 = arith.constant 0 : index
    %c0_4 = arith.constant 0 : index
    %c0_5 = arith.constant 0 : index
    %1 = vector.load %arg2[%c0_3, %c0_4, %c0_5] : memref<5x1x512xf32, #tpu.memory_space<vmem>>, vector<5x1x512xf32>
    %2 = vector.shape_cast %1 : vector<5x1x512xf32> to vector<1x5x1x512xf32>
    %3 = vector.broadcast %2 : vector<1x5x1x512xf32> to vector<1x5x16x512xf32>
    %4 = arith.addf %0, %3 : vector<1x5x16x512xf32>
    %c0_6 = arith.constant 0 : index
    %c0_7 = arith.constant 0 : index
    %c0_8 = arith.constant 0 : index
    %c0_9 = arith.constant 0 : index
    %5 = vector.load %arg3[%c0_6, %c0_7, %c0_8, %c0_9] : memref<1x5x16x512xf32, #tpu.memory_space<vmem>>, vector<1x5x16x512xf32>
    tpu.vector_store %arg3[%c0_6, %c0_7, %c0_8, %c0_9], %4 {strides = array<i32>} : memref<1x5x16x512xf32, #tpu.memory_space<vmem>>, vector<1x5x16x512xf32>,
    return
  }
  func.func @transform_0(%arg0: i32) -> (i32, i32, i32, i32) {
    %c0_i32 = arith.constant 0 : i32
    %c0_i32_0 = arith.constant 0 : i32
    %c0_i32_1 = arith.constant 0 : i32
    %c0_i32_2 = arith.constant 0 : i32
    return %arg0, %c0_i32, %c0_i32_0, %c0_i32_1 : i32, i32, i32, i32
  }
  func.func @transform_1(%arg0: i32) -> (i32, i32, i32) {
    %c0_i32 = arith.constant 0 : i32
    %c0_i32_0 = arith.constant 0 : i32
    %c0_i32_1 = arith.constant 0 : i32
    %c0_i32_2 = arith.constant 0 : i32
    return %c0_i32, %c0_i32_0, %c0_i32_1 : i32, i32, i32
  }
  func.func @transform_2(%arg0: i32) -> (i32, i32, i32, i32) {
    %c0_i32 = arith.constant 0 : i32
    %c0_i32_0 = arith.constant 0 : i32
    %c0_i32_1 = arith.constant 0 : i32
    %c0_i32_2 = arith.constant 0 : i32
    return %arg0, %c0_i32, %c0_i32_0, %c0_i32_1 : i32, i32, i32, i32
  }
}

</mosaic_0001>

<llo_original>
// kernel: tpu_custom_call.1
$region0: #{tpu_custom_call.1}
  #allocation0 [shape = 'u32[]', space=smem, size = 0x4, offset = 0x4, fixed_abs, tag = 'smem constant byte address 0x4 - core index']
  #allocation1 [shape = 'u32[72,128]{1,0:T(1,128)}', space=vmem, size = 0x9000, scoped, tag = 'internal scratch']
  %s0 = inlined_call_operand.hbm [shape: f32[2,5,16,512], index: 0, kind: input, shape index: {}]
  %s1 = inlined_call_operand.hbm [shape: f32[5,1,512], index: 1, kind: input, shape index: {}]
  %s2 = inlined_call_operand.hbm [shape: f32[2,5,16,512], index: 2, kind: output, shape index: {}]
  %s3 = sld [smem:[#allocation0]]
  $region49: #{tpu_custom_call.1} parent=0
    _
  %s5 = ssub.s32 1, %s3
  %s6 = scalar_select 0, %s5, %s3
  $region1: #{tpu_custom_call.1} parent=0
    #allocation2 [shape = 'u8[327680]{0}', space=vmem, size = 0x50000, scoped, tag = 'input window, operand 0']
    #allocation3 [shape = 's32[2]{0}', space=sflag, size = 0x8, scoped, tag = 'scoped memory for tpu_custom_call.1']
    #allocation4 [shape = 's32[2]{0}', space=sflag, size = 0x8, scoped, tag = 'scoped memory for tpu_custom_call.1']
    #allocation5 [shape = 'u8[10240]{0}', space=vmem, size = 0x2800, scoped, tag = 'input window, operand 1, single buffered']
    #allocation6 [shape = 's32[1]{0}', space=sflag, size = 0x4, scoped, tag = 'scoped memory for tpu_custom_call.1']
    #allocation7 [shape = 'u8[327680]{0}', space=vmem, size = 0x50000, scoped, tag = 'output window, operand 0']
    %7 = vsyncpa [#allocation3], 0
    %s8 = scalar_lea.sflag [#allocation3], 1
    %9 = vsyncpa %s8, 0
    %10 = vsyncpa [#allocation6], 0
    %11 = vsyncpa [#allocation4], 0
    %s12 = scalar_lea.sflag [#allocation4], 1
    %13 = vsyncpa %s12, 0
    loop: start=0, step=1, limit=4
    $region2: #{tpu_custom_call.1} parent=1 // loop_pre_header
      _
    $region3: #{tpu_custom_call.1} parent=1 // loop_header
      %s15 = sphi 0, %s19
      %p16 = scmp.ge.s32.totalorder %s15, 4
      %s25 = sphi 0, %s27
      %s28 = sphi 0, %s25
      %s29 = sphi 0, %s28
      %s45 = sphi 0, %s29
      %s49 = sphi 0, %s49
      %s51 = sphi 0, %s49
      %s52 = sphi 0, %s51
      %s66 = sphi 0, %s52
      %s72 = sphi 0, %s74
      %s75 = sphi 0, %s72
      %s76 = sphi 0, %s75
      %s92 = sphi 0, %s76
    $region4: #{tpu_custom_call.1} parent=1 // loop_header_branch
      %18 = sbr.rel (%p16) target = $region8
    $region5: #{tpu_custom_call.1} parent=1 // loop_body
      %s20 = ssub.s32 %s15, 1
      %s21 = ssub.s32 %s15, 2
      %s22 = sadd.s32 %s15, 1
      %s23 = ssub.s32 %s15, %s22
      %p24 = scmp.eq.s32.totalorder %s23, 0
      %s26 = sadd.s32 %s25, 1
      %s27 = scalar_select %p24, %s25, %s26
      %p30 = pneg %p24
      %p31 = scmp.eq.s32.totalorder %s15, 1
      %p32 = por %p30, %p31
      %p33 = scmp.ne.s32.totalorder %s25, %s28
      %p34 = scmp.eq.s32.totalorder %s15, 0
      %p35 = por %p33, %p34
      %p36 = scmp.ne.s32.totalorder %s25, %s28
      %p37 = scmp.eq.s32.totalorder %s20, 1
      %p38 = por %p36, %p37
      %p39 = scmp.ne.s32.totalorder %s28, %s29
      %p40 = scmp.eq.s32.totalorder %s20, 0
      %p41 = por %p39, %p40
      %p42 = scmp.ne.s32.totalorder %s28, %s29
      %p43 = scmp.eq.s32.totalorder %s21, 1
      %p44 = por %p42, %p43
      %p46 = scmp.ne.s32.totalorder %s29, %s45
      %p47 = scmp.eq.s32.totalorder %s21, 0
      %p48 = por %p46, %p47
      %s50 = sadd.s32 %s49, 1
      %p53 = scmp.eq.s32.totalorder %s15, 1
      %p54 = scmp.ne.s32.totalorder %s49, %s51
      %p55 = scmp.eq.s32.totalorder %s15, 0
      %p56 = por %p54, %p55
      %p57 = scmp.ne.s32.totalorder %s49, %s51
      %p58 = scmp.eq.s32.totalorder %s20, 1
      %p59 = por %p57, %p58
      %p60 = scmp.ne.s32.totalorder %s51, %s52
      %p61 = scmp.eq.s32.totalorder %s20, 0
      %p62 = por %p60, %p61
      %p63 = scmp.ne.s32.totalorder %s51, %s52
      %p64 = scmp.eq.s32.totalorder %s21, 1
      %p65 = por %p63, %p64
      %p67 = scmp.ne.s32.totalorder %s52, %s66
      %p68 = scmp.eq.s32.totalorder %s21, 0
      %p69 = por %p67, %p68
      %s70 = ssub.s32 %s15, %s22
      %p71 = scmp.eq.s32.totalorder %s70, 0
      %s73 = sadd.s32 %s72, 1
      %s74 = scalar_select %p71, %s72, %s73
      %p77 = pneg %p71
      %p78 = scmp.eq.s32.totalorder %s15, 1
      %p79 = por %p77, %p78
      %p80 = scmp.ne.s32.totalorder %s72, %s75
      %p81 = scmp.eq.s32.totalorder %s15, 0
      %p82 = por %p80, %p81
      %p83 = scmp.ne.s32.totalorder %s72, %s75
      %p84 = scmp.eq.s32.totalorder %s20, 1
      %p85 = por %p83, %p84
      %p86 = scmp.ne.s32.totalorder %s75, %s76
      %p87 = scmp.eq.s32.totalorder %s20, 0
      %p88 = por %p86, %p87
      %p89 = scmp.ne.s32.totalorder %s75, %s76
      %p90 = scmp.eq.s32.totalorder %s21, 1
      %p91 = por %p89, %p90
      %p93 = scmp.ne.s32.totalorder %s76, %s92
      %p94 = scmp.eq.s32.totalorder %s21, 0
      %p95 = por %p93, %p94
      %p96 = scmp.le.s32.totalorder 1, %s15
      %p97 = scmp.lt.s32.totalorder %s15, 3
      %p98 = pnand %p96, %p97
      %p99 = pneg %p98
      // Predicated region
      $region9: #{tpu_custom_call.1} parent=5 // pred_check
        _
      $region10: #{tpu_custom_call.1} parent=5 // pred_check_branch
        %101 = sbr.rel (%p98) target = $region12
      $region11: #{tpu_custom_call.1} parent=5 // pred_region
        %s102 = ssub.s32 %s15, 1
        // Predicated region
        $region13: #{tpu_custom_call.1} parent=11 // pred_check
          %p103 = pneg %p62
        $region14: #{tpu_custom_call.1} parent=11 // pred_check_branch
          %105 = sbr.rel (%p103) target = $region16
        $region15: #{tpu_custom_call.1} parent=11 // pred_region
          %107 = vsyncadd [#allocation6], 0
          %s108 = sshll.u32 %s1, 4
          %s109 = int_to_ptr.hbm [resolvable:$true] %s108
          %s110 = sshll.u32 [#allocation5], 4
          %s111 = int_to_ptr.vmem [resolvable:$true] %s110
          %116 = dma.hbm_to_vmem [thread:$0]  %s109, 320, %s111, [#allocation6], 64, 64, 4
        $region16: #{tpu_custom_call.1} parent=11 // pred_fallthru
          _
      $region12: #{tpu_custom_call.1} parent=5 // pred_fallthru
        _
      %p117 = scmp.lt.s32.totalorder %s15, 2
      // Predicated region
      $region17: #{tpu_custom_call.1} parent=5 // pred_check
        %p118 = pneg %p117
      $region18: #{tpu_custom_call.1} parent=5 // pred_check_branch
        %120 = sbr.rel (%p118) target = $region20
      $region19: #{tpu_custom_call.1} parent=5 // pred_region
        // Predicated region
        $region21: #{tpu_custom_call.1} parent=19 // pred_check
          %p121 = pneg %p35
        $region22: #{tpu_custom_call.1} parent=19 // pred_check_branch
          %123 = sbr.rel (%p121) target = $region24
        $region23: #{tpu_custom_call.1} parent=19 // pred_region
          %s124 = sand.u32 %s25, 1
          %s125 = scalar_lea.sflag [#allocation3], %s124
          %s126 = sand.u32 %s25, 1
          %s127 = smul.addr %s126, 320
          %s128 = scalar_lea.vmem [#allocation2], %s127
          %130 = vsyncadd %s125, 0
          %s131 = smul.addr %s15, 40
          %s132 = smul.addr %s131, 8
          %s133 = scalar_lea.hbm %s0, %s132
          %s134 = sshll.u32 %s133, 4
          %s135 = int_to_ptr.hbm [resolvable:$true] %s134
          %s136 = sshll.u32 %s128, 4
          %s137 = int_to_ptr.vmem [resolvable:$true] %s136
          %142 = dma.hbm_to_vmem [thread:$0]  %s135, 5120, %s137, %s125, 512, 512, 32
        $region24: #{tpu_custom_call.1} parent=19 // pred_fallthru
          _
      $region20: #{tpu_custom_call.1} parent=5 // pred_fallthru
        _
      %p143 = scmp.le.s32.totalorder 1, %s15
      %p144 = scmp.lt.s32.totalorder %s15, 3
      %p145 = pnand %p143, %p144
      %p146 = pneg %p145
      // Predicated region
      $region25: #{tpu_custom_call.1} parent=5 // pred_check
        _
      $region26: #{tpu_custom_call.1} parent=5 // pred_check_branch
        %148 = sbr.rel (%p145) target = $region28
      $region27: #{tpu_custom_call.1} parent=5 // pred_region
        %s149 = ssub.s32 %s15, 1
        %s150 = sand.u32 %s28, 1
        %s151 = scalar_lea.sflag [#allocation3], %s150
        %s152 = sand.u32 %s28, 1
        %s153 = smul.addr %s152, 320
        %s154 = scalar_lea.vmem [#allocation2], %s153
        // Predicated region
        $region29: #{tpu_custom_call.1} parent=27 // pred_check
          %p155 = pneg %p41
        $region30: #{tpu_custom_call.1} parent=27 // pred_check_branch
          %157 = sbr.rel (%p155) target = $region32
        $region31: #{tpu_custom_call.1} parent=27 // pred_region
          %159 = dma.done %s151, 5120
        $region32: #{tpu_custom_call.1} parent=27 // pred_fallthru
          _
        // Predicated region
        $region33: #{tpu_custom_call.1} parent=27 // pred_check
          %p160 = pneg %p62
        $region34: #{tpu_custom_call.1} parent=27 // pred_check_branch
          %162 = sbr.rel (%p160) target = $region36
        $region35: #{tpu_custom_call.1} parent=27 // pred_region
          %164 = dma.done [#allocation6], 320
        $region36: #{tpu_custom_call.1} parent=27 // pred_fallthru
          _
        %s165 = sand.u32 %s28, 1
        %s166 = scalar_lea.sflag [#allocation3], %s165
        %s167 = sand.u32 %s28, 1
        %s168 = smul.addr %s167, 320
        %s169 = scalar_lea.vmem [#allocation2], %s168
        %p170 = pneg %p41
        %p171 = pneg %p38
        %p172 = pneg %p62
        %p173 = pneg %p59
        %p174 = pneg %p88
        %p175 = pneg %p85
        %s176 = sand.u32 %s75, 1
        %s177 = scalar_lea.sflag [#allocation4], %s176
        %s178 = sand.u32 %s75, 1
        %s179 = smul.addr %s178, 320
        %s180 = scalar_lea.vmem [#allocation7], %s179
        %v181 = vld [vmem:[%s154] sm:$0xff]
        %v182 = vld [vmem:[%s154 + $0x8] sm:$0xff]
        %v183 = vld [vmem:[%s154 + $0x10] sm:$0xff]
        %v184 = vld [vmem:[%s154 + $0x18] sm:$0xff]
        %v185 = vld [vmem:[%s154 + $0x20] sm:$0xff]
        %v186 = vld [vmem:[%s154 + $0x28] sm:$0xff]
        %v187 = vld [vmem:[%s154 + $0x30] sm:$0xff]
        %v188 = vld [vmem:[%s154 + $0x38] sm:$0xff]
        %v189 = vld [vmem:[%s154 + $0x40] sm:$0xff]
        %v190 = vld [vmem:[%s154 + $0x48] sm:$0xff]
        %v191 = vld [vmem:[%s154 + $0x50] sm:$0xff]
        %v192 = vld [vmem:[%s154 + $0x58] sm:$0xff]
        %v193 = vld [vmem:[%s154 + $0x60] sm:$0xff]
        %v194 = vld [vmem:[%s154 + $0x68] sm:$0xff]
        %v195 = vld [vmem:[%s154 + $0x70] sm:$0xff]
        %v196 = vld [vmem:[%s154 + $0x78] sm:$0xff]
        %v197 = vld [vmem:[%s154 + $0x80] sm:$0xff]
        %v198 = vld [vmem:[%s154 + $0x88] sm:$0xff]
        %v199 = vld [vmem:[%s154 + $0x90] sm:$0xff]
        %v200 = vld [vmem:[%s154 + $0x98] sm:$0xff]
        %v201 = vld [vmem:[%s154 + $0xa0] sm:$0xff]
        %v202 = vld [vmem:[%s154 + $0xa8] sm:$0xff]
        %v203 = vld [vmem:[%s154 + $0xb0] sm:$0xff]
        %v204 = vld [vmem:[%s154 + $0xb8] sm:$0xff]
        %v205 = vld [vmem:[%s154 + $0xc0] sm:$0xff]
        %v206 = vld [vmem:[%s154 + $0xc8] sm:$0xff]
        %v207 = vld [vmem:[%s154 + $0xd0] sm:$0xff]
        %v208 = vld [vmem:[%s154 + $0xd8] sm:$0xff]
        %v209 = vld [vmem:[%s154 + $0xe0] sm:$0xff]
        %v210 = vld [vmem:[%s154 + $0xe8] sm:$0xff]
        %v211 = vld [vmem:[%s154 + $0xf0] sm:$0xff]
        %v212 = vld [vmem:[%s154 + $0xf8] sm:$0xff]
        %v213 = vld [vmem:[%s154 + $0x100] sm:$0xff]
        %v214 = vld [vmem:[%s154 + $0x108] sm:$0xff]
        %v215 = vld [vmem:[%s154 + $0x110] sm:$0xff]
        %v216 = vld [vmem:[%s154 + $0x118] sm:$0xff]
        %v217 = vld [vmem:[%s154 + $0x120] sm:$0xff]
        %v218 = vld [vmem:[%s154 + $0x128] sm:$0xff]
        %v219 = vld [vmem:[%s154 + $0x130] sm:$0xff]
        %v220 = vld [vmem:[%s154 + $0x138] sm:$0xff]
        %v221 = vld [vmem:[#allocation5] sm:$0xf]
        %v222 = vld [vmem:[#allocation5 + $0x4] sm:$0xf]
        %v223 = vld [vmem:[#allocation5 + $0x8] sm:$0xf]
        %v224 = vld [vmem:[#allocation5 + $0xc] sm:$0xf]
        %v225 = vld [vmem:[#allocation5 + $0x10] sm:$0xf]
        %v231 = vperm.slane %v221, 0
        %v232 = vperm.slane %v221, 1
        %v233 = vperm.slane %v221, 2
        %v234 = vperm.slane %v221, 3
        %v235 = vperm.slane %v222, 0
        %v236 = vperm.slane %v222, 1
        %v237 = vperm.slane %v222, 2
        %v238 = vperm.slane %v222, 3
        %v239 = vperm.slane %v223, 0
        %v240 = vperm.slane %v223, 1
        %v241 = vperm.slane %v223, 2
        %v242 = vperm.slane %v223, 3
        %v243 = vperm.slane %v224, 0
        %v244 = vperm.slane %v224, 1
        %v245 = vperm.slane %v224, 2
        %v246 = vperm.slane %v224, 3
        %v247 = vperm.slane %v225, 0
        %v248 = vperm.slane %v225, 1
        %v249 = vperm.slane %v225, 2
        %v250 = vperm.slane %v225, 3
        %v271 = vadd.f32 %v181, %v231
        %v272 = vadd.f32 %v182, %v232
        %v273 = vadd.f32 %v183, %v233
        %v274 = vadd.f32 %v184, %v234
        %v275 = vadd.f32 %v185, %v231
        %v276 = vadd.f32 %v186, %v232
        %v277 = vadd.f32 %v187, %v233
        %v278 = vadd.f32 %v188, %v234
        %v279 = vadd.f32 %v189, %v235
        %v280 = vadd.f32 %v190, %v236
        %v281 = vadd.f32 %v191, %v237
        %v282 = vadd.f32 %v192, %v238
        %v283 = vadd.f32 %v193, %v235
        %v284 = vadd.f32 %v194, %v236
        %v285 = vadd.f32 %v195, %v237
        %v286 = vadd.f32 %v196, %v238
        %v287 = vadd.f32 %v197, %v239
        %v288 = vadd.f32 %v198, %v240
        %v289 = vadd.f32 %v199, %v241
        %v290 = vadd.f32 %v200, %v242
        %v291 = vadd.f32 %v201, %v239
        %v292 = vadd.f32 %v202, %v240
        %v293 = vadd.f32 %v203, %v241
        %v294 = vadd.f32 %v204, %v242
        %v295 = vadd.f32 %v205, %v243
        %v296 = vadd.f32 %v206, %v244
        %v297 = vadd.f32 %v207, %v245
        %v298 = vadd.f32 %v208, %v246
        %v299 = vadd.f32 %v209, %v243
        %v300 = vadd.f32 %v210, %v244
        %v301 = vadd.f32 %v211, %v245
        %v302 = vadd.f32 %v212, %v246
        %v303 = vadd.f32 %v213, %v247
        %v304 = vadd.f32 %v214, %v248
        %v305 = vadd.f32 %v215, %v249
        %v306 = vadd.f32 %v216, %v250
        %v307 = vadd.f32 %v217, %v247
        %v308 = vadd.f32 %v218, %v248
        %v309 = vadd.f32 %v219, %v249
        %v310 = vadd.f32 %v220, %v250
        %311 = vst [vmem:[%s180] sm:$0xff] %v271
        %312 = vst [vmem:[%s180 + $0x8] sm:$0xff] %v272
        %313 = vst [vmem:[%s180 + $0x10] sm:$0xff] %v273
        %314 = vst [vmem:[%s180 + $0x18] sm:$0xff] %v274
        %315 = vst [vmem:[%s180 + $0x20] sm:$0xff] %v275
        %316 = vst [vmem:[%s180 + $0x28] sm:$0xff] %v276
        %317 = vst [vmem:[%s180 + $0x30] sm:$0xff] %v277
        %318 = vst [vmem:[%s180 + $0x38] sm:$0xff] %v278
        %319 = vst [vmem:[%s180 + $0x40] sm:$0xff] %v279
        %320 = vst [vmem:[%s180 + $0x48] sm:$0xff] %v280
        %321 = vst [vmem:[%s180 + $0x50] sm:$0xff] %v281
        %322 = vst [vmem:[%s180 + $0x58] sm:$0xff] %v282
        %323 = vst [vmem:[%s180 + $0x60] sm:$0xff] %v283
        %324 = vst [vmem:[%s180 + $0x68] sm:$0xff] %v284
        %325 = vst [vmem:[%s180 + $0x70] sm:$0xff] %v285
        %326 = vst [vmem:[%s180 + $0x78] sm:$0xff] %v286
        %327 = vst [vmem:[%s180 + $0x80] sm:$0xff] %v287
        %328 = vst [vmem:[%s180 + $0x88] sm:$0xff] %v288
        %329 = vst [vmem:[%s180 + $0x90] sm:$0xff] %v289
        %330 = vst [vmem:[%s180 + $0x98] sm:$0xff] %v290
        %331 = vst [vmem:[%s180 + $0xa0] sm:$0xff] %v291
        %332 = vst [vmem:[%s180 + $0xa8] sm:$0xff] %v292
        %333 = vst [vmem:[%s180 + $0xb0] sm:$0xff] %v293
        %334 = vst [vmem:[%s180 + $0xb8] sm:$0xff] %v294
        %335 = vst [vmem:[%s180 + $0xc0] sm:$0xff] %v295
        %336 = vst [vmem:[%s180 + $0xc8] sm:$0xff] %v296
        %337 = vst [vmem:[%s180 + $0xd0] sm:$0xff] %v297
        %338 = vst [vmem:[%s180 + $0xd8] sm:$0xff] %v298
        %339 = vst [vmem:[%s180 + $0xe0] sm:$0xff] %v299
        %340 = vst [vmem:[%s180 + $0xe8] sm:$0xff] %v300
        %341 = vst [vmem:[%s180 + $0xf0] sm:$0xff] %v301
        %342 = vst [vmem:[%s180 + $0xf8] sm:$0xff] %v302
        %343 = vst [vmem:[%s180 + $0x100] sm:$0xff] %v303
        %344 = vst [vmem:[%s180 + $0x108] sm:$0xff] %v304
        %345 = vst [vmem:[%s180 + $0x110] sm:$0xff] %v305
        %346 = vst [vmem:[%s180 + $0x118] sm:$0xff] %v306
        %347 = vst [vmem:[%s180 + $0x120] sm:$0xff] %v307
        %348 = vst [vmem:[%s180 + $0x128] sm:$0xff] %v308
        %349 = vst [vmem:[%s180 + $0x130] sm:$0xff] %v309
        %350 = vst [vmem:[%s180 + $0x138] sm:$0xff] %v310
        %s351 = sand.u32 %s75, 1
        %s352 = scalar_lea.sflag [#allocation4], %s351
        %s353 = sand.u32 %s75, 1
        %s354 = smul.addr %s353, 320
        %s355 = scalar_lea.vmem [#allocation7], %s354
        // Predicated region
        $region37: #{tpu_custom_call.1} parent=27 // pred_check
          %p356 = pneg %p85
        $region38: #{tpu_custom_call.1} parent=27 // pred_check_branch
          %358 = sbr.rel (%p356) target = $region40
        $region39: #{tpu_custom_call.1} parent=27 // pred_region
          %360 = vsyncadd %s352, 0
          %s361 = smul.addr %s20, 40
          %s362 = smul.addr %s361, 8
          %s363 = scalar_lea.hbm %s2, %s362
          %s364 = sshll.u32 %s355, 4
          %s365 = int_to_ptr.vmem [resolvable:$true] %s364
          %s366 = sshll.u32 %s363, 4
          %s367 = int_to_ptr.hbm [resolvable:$true] %s366
          %372 = dma.vmem_to_hbm [thread:$0]  %s365, 5120, %s367, %s352, 512, 512, 32
        $region40: #{tpu_custom_call.1} parent=27 // pred_fallthru
          _
      $region28: #{tpu_custom_call.1} parent=5 // pred_fallthru
        _
      %p373 = scmp.le.s32.totalorder 2, %s15
      // Predicated region
      $region41: #{tpu_custom_call.1} parent=5 // pred_check
        %p374 = pneg %p373
      $region42: #{tpu_custom_call.1} parent=5 // pred_check_branch
        %376 = sbr.rel (%p374) target = $region44
      $region43: #{tpu_custom_call.1} parent=5 // pred_region
        %s377 = ssub.s32 %s15, 2
        // Predicated region
        $region45: #{tpu_custom_call.1} parent=43 // pred_check
          %p378 = pneg %p91
        $region46: #{tpu_custom_call.1} parent=43 // pred_check_branch
          %380 = sbr.rel (%p378) target = $region48
        $region47: #{tpu_custom_call.1} parent=43 // pred_region
          %s381 = sand.u32 %s76, 1
          %s382 = scalar_lea.sflag [#allocation4], %s381
          %s383 = sand.u32 %s76, 1
          %s384 = smul.addr %s383, 320
          %s385 = scalar_lea.vmem [#allocation7], %s384
          %387 = dma.done %s382, 5120
        $region48: #{tpu_custom_call.1} parent=43 // pred_fallthru
          _
      $region44: #{tpu_custom_call.1} parent=5 // pred_fallthru
        _
    $region6: #{tpu_custom_call.1} parent=1 // loop_footer
      %s19 = sadd.s32 1, %s15
    $region7: #{tpu_custom_call.1} parent=1 // loop_footer_branch
      %14 = sbr.rel target = $region3
    $region8: #{tpu_custom_call.1} parent=1 // loop_exit
      _
    %388 = vsyncpa [#allocation3], 1
    %s389 = scalar_lea.sflag [#allocation3], 1
    %390 = vsyncpa %s389, 1
    %391 = vsyncpa [#allocation6], 1
    %392 = vsyncpa [#allocation4], 1
    %s393 = scalar_lea.sflag [#allocation4], 1
    %394 = vsyncpa %s393, 1

</llo_original>
